<compile_context>
chip_gen: v7x
topology: tpu7x:2x2x1
jax: 0.10.0
libtpu: 0.0.40
codegen_flags: <defaults>
</compile_context>

<pallas_src>
import jax
import jax.numpy as jnp
from jax import lax
from jax.experimental import pallas as pl
from jax.experimental.pallas import tpu as pltpu


_INV_SQRT2 = 0.7071067811865476
_SQRT_2_OVER_PI = 0.7978845608028654


def _round_up(a: int, b: int) -> int:
    return ((a + b - 1) // b) * b


def _vmem_budget_bytes() -> int:
    """Generation-aware VMEM budget: 75% of capacity, capped at 96 MiB."""
    cap = None
    try:
        info = pltpu.get_tpu_info()
        cap = getattr(info, "vmem_capacity_bytes", None)
    except Exception:
        cap = None
    if not cap or cap <= 0:
        cap = 64 << 20          # conservative fallback (v7x per-TC VMEM)
    return int(min(0.75 * cap, 96 << 20))


def _select_tiles(M, D, mlp, tm_target, tk_target, in_itm, out_itm, budget,
                  row_align):
    """Pick (tm, tk, mlp_pad). Maximize tm first, then tk; shrink tk before tm."""
    mlp_pad = _round_up(mlp, 128)
    tk_target = max(128, tk_target)

    # tk candidates: multiples of 128 that evenly divide the padded hidden dim.
    cands = [t for t in range(128, mlp_pad + 1, 128) if mlp_pad % t == 0]

    def vmem_needed(tm_, tk_):
        per_step = (tm_ * D * in_itm        # x tile
                    + D * tk_ * in_itm      # W1 chunk
                    + tk_ * D * in_itm      # W2 chunk
                    + 8 * tk_ * 4           # b1 chunk (sublane-padded, f32)
                    + 8 * D * 4             # b2 (sublane-padded, f32)
                    + tm_ * D * out_itm)    # out tile
        return 2 * per_step + tm_ * D * 4   # double-buffered inputs/out + f32 acc

    # Row tile: multiple of 256 (MXU-friendly), clipped for small M.
    tm = min(_round_up(tm_target, 256), _round_up(M, row_align))
    tm = max(tm, row_align)

    while True:
        tk = None
        for c in reversed(cands):           # largest first
            if c <= tk_target and vmem_needed(tm, c) <= budget:
                tk = c
                break
        if tk is not None:
            return tm, tk, mlp_pad
        # Even tk=128 does not fit at this tm -> shrink tm (last resort).
        if tm > 256:
            tm = max(256, tm - 256)
        elif tm > row_align:
            tm = max(row_align, _round_up(tm // 2, row_align))
        else:
            return tm, 128, mlp_pad         # best effort


def _make_kernel(approximate_gelu: bool):
    def kernel(x_ref, w1_ref, b1_ref, w2_ref, b2_ref, o_ref, acc_ref):
        # x_ref:  (tm, D)     row tile of flattened tokens (compute dtype)
        # w1_ref: (D, tk)     hidden chunk of lin1 weight (in x out layout)
        # b1_ref: (1, tk)     hidden chunk of lin1 bias (f32)
        # w2_ref: (tk, D)     hidden chunk of lin2 weight
        # b2_ref: (1, D)      lin2 bias (f32)
        # acc_ref:(tm, D)     f32 accumulator, resident across the k axis
        k = pl.program_id(1)

        @pl.when(k == 0)
        def _():
            acc_ref[...] = jnp.zeros_like(acc_ref)

        # lin1 chunk: (tm, tk) with f32 accumulation on the MXU.
        h = jnp.dot(x_ref[...], w1_ref[...], preferred_element_type=jnp.float32)
        h = h + b1_ref[...]

        if approximate_gelu:
            # tanh GELU: routes through the EUP slot (cheaper than the erf
            # VALU polynomial); slightly different numerics vs torch default.
            h = 0.5 * h * (1.0 + jnp.tanh(
                _SQRT_2_OVER_PI * (h + 0.044715 * h * h * h)))
        else:
            # Exact erf GELU in f32 — matches torch.nn.GELU default.
            h = 0.5 * h * (1.0 + lax.erf(h * _INV_SQRT2))

        # lin2 chunk, accumulated in f32. Cast h to the weight dtype so bf16
        # weights take the bf16 MXU path.
        acc_ref[...] += jnp.dot(h.astype(w2_ref.dtype), w2_ref[...],
                                preferred_element_type=jnp.float32)

        @pl.when(k == pl.num_programs(1) - 1)
        def _():
            o_ref[...] = (acc_ref[...] + b2_ref[...]).astype(o_ref.dtype)

    return kernel


def mlp_block(x, w1, b1, w2, b2, *, tm=1024, tk_mlp=2048,
              compute_dtype=jnp.bfloat16, approximate_gelu=False):
    """SAM MLPBlock forward.

    x:  (B, N, D)              tokens, channels-last
    w1: (D, mlp)  b1: (mlp,)   lin1 (weights stored as (in, out))
    w2: (mlp, D)  b2: (D,)     lin2
    compute_dtype: dtype for the MXU operands (default bf16); GELU / biases /
                   accumulation always run in f32. Pass jnp.float32 for an
                   exact-f32 path.
    """
    B, N, D = x.shape
    mlp = w1.shape[1]
    M = B * N
    out_dtype = x.dtype

    cdt = jnp.dtype(compute_dtype) if compute_dtype is not None else jnp.dtype(x.dtype)
    in_itm = cdt.itemsize
    out_itm = jnp.dtype(out_dtype).itemsize
    row_align = 16 if in_itm < 4 else 8          # bf16 packs 16 rows / vreg

    # --- tile selection (generation-aware VMEM budget) ----------------------
    budget = _vmem_budget_bytes()
    tm_eff, tk, mlp_pad = _select_tiles(M, D, mlp, tm, tk_mlp,
                                        in_itm, out_itm, budget, row_align)
    M_pad = _round_up(M, tm_eff)
    n_k = mlp_pad // tk
    n_row_tiles = M_pad // tm_eff

    # --- operand prep --------------------------------------------------------
    x2 = x.reshape(M, D).astype(cdt)
    if M_pad != M:
        x2 = jnp.pad(x2, ((0, M_pad - M), (0, 0)))          # tail rows dropped later

    w1c = w1.astype(cdt)
    w2c = w2.astype(cdt)
    b1_2 = b1.reshape(1, mlp).astype(jnp.float32)
    b2_2 = b2.reshape(1, D).astype(jnp.float32)
    if mlp_pad != mlp:
        # Zero-pad the hidden dim: h_pad = gelu(0 + 0) = 0 -> contributes nothing.
        w1c = jnp.pad(w1c, ((0, 0), (0, mlp_pad - mlp)))
        b1_2 = jnp.pad(b1_2, ((0, 0), (0, mlp_pad - mlp)))
        w2c = jnp.pad(w2c, ((0, mlp_pad - mlp), (0, 0)))

    # --- VMEM limit & cost estimate ------------------------------------------
    vmem_needed = (2 * (tm_eff * D * in_itm + D * tk * in_itm + tk * D * in_itm
                        + 8 * tk * 4 + 8 * D * 4 + tm_eff * D * out_itm)
                   + tm_eff * D * 4)
    vmem_limit = int(min(budget, max(int(vmem_needed * 1.25), 16 << 20)))

    cost = pl.CostEstimate(
        flops=4 * M_pad * D * mlp_pad,                       # two matmuls
        transcendentals=M_pad * mlp_pad,                     # erf/tanh per hidden elem
        bytes_accessed=(M_pad * D * (in_itm + out_itm)       # read x + write out
                        + n_row_tiles * (D * mlp_pad * in_itm + mlp_pad * 4
                                         + mlp_pad * D * in_itm + D * 4)),
    )

    # TODO(synk): pipeline_mode=pl.Buffered(1) on the grid-invariant b2 (and x
    # over k) would recover a few MiB of VMEM on v7x; omitted for portability.
    out2 = pl.pallas_call(
        _make_kernel(approximate_gelu),
        out_shape=jax.ShapeDtypeStruct((M_pad, D), out_dtype),
        grid_spec=pltpu.PrefetchScalarGridSpec(
            num_scalar_prefetch=0,
            grid=(n_row_tiles, n_k),
            in_specs=[
                pl.BlockSpec((tm_eff, D), lambda i, k: (i, 0)),   # x row tile
                pl.BlockSpec((D, tk), lambda i, k: (0, k)),       # W1 hidden chunk
                pl.BlockSpec((1, tk), lambda i, k: (0, k)),       # b1 hidden chunk
                pl.BlockSpec((tk, D), lambda i, k: (k, 0)),       # W2 hidden chunk
                pl.BlockSpec((1, D), lambda i, k: (0, 0)),        # b2
            ],
            out_specs=pl.BlockSpec((tm_eff, D), lambda i, k: (i, 0)),
            scratch_shapes=[pltpu.VMEM((tm_eff, D), jnp.float32)],
        ),
        compiler_params=pltpu.CompilerParams(
            dimension_semantics=("parallel", "arbitrary"),
            vmem_limit_bytes=vmem_limit,
        ),
        cost_estimate=cost,
    )(x2, w1c, b1_2, w2c, b2_2)

    return out2[:M].reshape(B, N, D)


def _reference(x, w1, b1, w2, b2):
    h = jnp.einsum("bnd,dm->bnm", x, w1) + b1
    h = 0.5 * h * (1.0 + lax.erf(h * _INV_SQRT2))
    return jnp.einsum("bnm,md->bnd", h, w2) + b2


if __name__ == "__main__":
    # Small shapes consistent with MLPBlock(embedding_dim=32, mlp_dim=128),
    # applied to x of shape (batch=2, seq=8, embedding_dim=32).
    embedding_dim = 32
    mlp_dim = 128
    B, N = 2, 8

    key = jax.random.PRNGKey(0)
    kx, k1, k2, k3, k4 = jax.random.split(key, 5)

    x = jax.random.normal(kx, (B, N, embedding_dim), dtype=jnp.float32)

    # Deterministic synthetic parameters, stored as (in_features, out_features)
    # (transposed vs. torch's (out, in)).
    w1 = jax.random.normal(k1, (embedding_dim, mlp_dim), dtype=jnp.float32) * 0.02
    b1 = jax.random.normal(k2, (mlp_dim,), dtype=jnp.float32) * 0.02
    w2 = jax.random.normal(k3, (mlp_dim, embedding_dim), dtype=jnp.float32) * 0.02
    b2 = jax.random.normal(k4, (embedding_dim,), dtype=jnp.float32) * 0.02

    ref = _reference(x, w1, b1, w2, b2)

    # Default path: bf16 MXU operands, f32 GELU/bias/accumulation.
    out_bf16 = jax.block_until_ready(mlp_block(x, w1, b1, w2, b2))
    assert out_bf16.shape == (B, N, embedding_dim)
    assert jnp.allclose(out_bf16, ref, atol=2e-2, rtol=2e-2), (
        float(jnp.max(jnp.abs(out_bf16 - ref))))

    # Full-f32 path: tight check against the exact reference.
    out_f32 = jax.block_until_ready(
        mlp_block(x, w1, b1, w2, b2, compute_dtype=jnp.float32))
    assert jnp.allclose(out_f32, ref, atol=1e-5, rtol=1e-5), (
        float(jnp.max(jnp.abs(out_f32 - ref))))

    print("KERNEL_OK")
</pallas_src>

<mosaic_0001>
module attributes {stable_mosaic.version = 11 : i64} {
  func.func @kernel(%arg0: i32, %arg1: i32, %arg2: memref<16x32xbf16, #tpu.memory_space<vmem>>, %arg3: memref<32x128xbf16, #tpu.memory_space<vmem>>, %arg4: memref<1x128xf32, #tpu.memory_space<vmem>>, %arg5: memref<128x32xbf16, #tpu.memory_space<vmem>>, %arg6: memref<1x32xf32, #tpu.memory_space<vmem>>, %arg7: memref<16x32xf32, #tpu.memory_space<vmem>>, %arg8: memref<16x32xf32, #tpu.memory_space<vmem>>) attributes {dimension_semantics = [#tpu.dimension_semantics<parallel>, #tpu.dimension_semantics<arbitrary>], iteration_bounds = array<i64: 1, 1>, scalar_prefetch = 0 : i64, scratch_operands = 1 : i64, tpu.core_type = #tpu.core_type<tc>, window_params = [{transform_indices = @transform_0, window_bounds = array<i64: 16, 32>}, {transform_indices = @transform_1, window_bounds = array<i64: 32, 128>}, {transform_indices = @transform_2, window_bounds = array<i64: 1, 128>}, {transform_indices = @transform_3, window_bounds = array<i64: 128, 32>}, {pipeline_mode = #tpu.pipeline_mode<synchronous>, transform_indices = @transform_4, window_bounds = array<i64: 1, 32>}, {transform_indices = @transform_5, window_bounds = array<i64: 16, 32>}]} {
    %c0_i32 = arith.constant 0 : i32
    %0 = arith.cmpi eq, %arg1, %c0_i32 : i32
    %1 = arith.extui %0 : i1 to i32
    %c0_i32_0 = arith.constant 0 : i32
    %2 = arith.cmpi ne, %1, %c0_i32_0 : i32
    scf.if %2 {
      %cst_18 = arith.constant 0.000000e+00 : f32
      %26 = vector.broadcast %cst_18 : f32 to vector<16x32xf32>
      %c0_19 = arith.constant 0 : index
      %c0_20 = arith.constant 0 : index
      %27 = vector.load %arg8[%c0_19, %c0_20] : memref<16x32xf32, #tpu.memory_space<vmem>>, vector<16x32xf32>
      tpu.vector_store %arg8[%c0_19, %c0_20], %26 {strides = array<i32>} : memref<16x32xf32, #tpu.memory_space<vmem>>, vector<16x32xf32>,
    } else {
    }
    %c0 = arith.constant 0 : index
    %c0_1 = arith.constant 0 : index
    %3 = vector.load %arg2[%c0, %c0_1] : memref<16x32xbf16, #tpu.memory_space<vmem>>, vector<16x32xbf16>
    %c0_2 = arith.constant 0 : index
    %c0_3 = arith.constant 0 : index
    %4 = vector.load %arg3[%c0_2, %c0_3] : memref<32x128xbf16, #tpu.memory_space<vmem>>, vector<32x128xbf16>
    %cst = arith.constant dense<0.000000e+00> : vector<16x128xf32>
    %5 = tpu.matmul %3, %4, %cst {dimension_numbers = #tpu.dot_dimension_numbers<[1], [0], [0], [1], [0, 0, 1, 1], [], []>} : vector<16x32xbf16>, vector<32x128xbf16>, vector<16x128xf32> -> vector<16x128xf32>
    %c0_4 = arith.constant 0 : index
    %c0_5 = arith.constant 0 : index
    %6 = vector.load %arg4[%c0_4, %c0_5] : memref<1x128xf32, #tpu.memory_space<vmem>>, vector<1x128xf32>
    %7 = vector.broadcast %6 : vector<1x128xf32> to vector<16x128xf32>
    %8 = arith.addf %5, %7 : vector<16x128xf32>
    %cst_6 = arith.constant 5.000000e-01 : f32
    %9 = vector.broadcast %cst_6 : f32 to vector<16x128xf32>
    %10 = arith.mulf %9, %8 : vector<16x128xf32>
    %cst_7 = arith.constant 0.707106769 : f32
    %11 = vector.broadcast %cst_7 : f32 to vector<16x128xf32>
    %12 = arith.mulf %8, %11 : vector<16x128xf32>
    %13 = math.erf %12 : vector<16x128xf32>
    %cst_8 = arith.constant 1.000000e+00 : f32
    %14 = vector.broadcast %cst_8 : f32 to vector<16x128xf32>
    %15 = arith.addf %14, %13 : vector<16x128xf32>
    %16 = arith.mulf %10, %15 : vector<16x128xf32>
    %c0_9 = arith.constant 0 : index
    %c0_10 = arith.constant 0 : index
    %17 = vector.load %arg8[%c0_9, %c0_10] : memref<16x32xf32, #tpu.memory_space<vmem>>, vector<16x32xf32>
    %18 = arith.truncf %16 : vector<16x128xf32> to vector<16x128xbf16>
    %c0_11 = arith.constant 0 : index
    %c0_12 = arith.constant 0 : index
    %19 = vector.load %arg5[%c0_11, %c0_12] : memref<128x32xbf16, #tpu.memory_space<vmem>>, vector<128x32xbf16>
    %cst_13 = arith.constant dense<0.000000e+00> : vector<16x32xf32>
    %20 = tpu.matmul %18, %19, %cst_13 {dimension_numbers = #tpu.dot_dimension_numbers<[1], [0], [0], [1], [0, 0, 1, 1], [], []>} : vector<16x128xbf16>, vector<128x32xbf16>, vector<16x32xf32> -> vector<16x32xf32>
    %21 = arith.addf %17, %20 : vector<16x32xf32>
    %c0_14 = arith.constant 0 : index
    %c0_15 = arith.constant 0 : index
    %22 = vector.load %arg8[%c0_14, %c0_15] : memref<16x32xf32, #tpu.memory_space<vmem>>, vector<16x32xf32>
    tpu.vector_store %arg8[%c0_14, %c0_15], %21 {strides = array<i32>} : memref<16x32xf32, #tpu.memory_space<vmem>>, vector<16x32xf32>,
    %c0_i32_16 = arith.constant 0 : i32
    %23 = arith.cmpi eq, %arg1, %c0_i32_16 : i32
    %24 = arith.extui %23 : i1 to i32
    %c0_i32_17 = arith.constant 0 : i32
    %25 = arith.cmpi ne, %24, %c0_i32_17 : i32
    scf.if %25 {
      %c0_18 = arith.constant 0 : index
      %c0_19 = arith.constant 0 : index
      %26 = vector.load %arg8[%c0_18, %c0_19] : memref<16x32xf32, #tpu.memory_space<vmem>>, vector<16x32xf32>
      %c0_20 = arith.constant 0 : index
      %c0_21 = arith.constant 0 : index
      %27 = vector.load %arg6[%c0_20, %c0_21] : memref<1x32xf32, #tpu.memory_space<vmem>>, vector<1x32xf32>
      %28 = vector.broadcast %27 : vector<1x32xf32> to vector<16x32xf32>
      %29 = arith.addf %26, %28 : vector<16x32xf32>
      %c0_22 = arith.constant 0 : index
      %c0_23 = arith.constant 0 : index
      %30 = vector.load %arg7[%c0_22, %c0_23] : memref<16x32xf32, #tpu.memory_space<vmem>>, vector<16x32xf32>
      tpu.vector_store %arg7[%c0_22, %c0_23], %29 {strides = array<i32>} : memref<16x32xf32, #tpu.memory_space<vmem>>, vector<16x32xf32>,
    } else {
    }
    return
  }
  func.func @transform_0(%arg0: i32, %arg1: i32) -> (i32, i32) {
    %c0_i32 = arith.constant 0 : i32
    %c0_i32_0 = arith.constant 0 : i32
    return %arg0, %c0_i32 : i32, i32
  }
  func.func @transform_1(%arg0: i32, %arg1: i32) -> (i32, i32) {
    %c0_i32 = arith.constant 0 : i32
    %c0_i32_0 = arith.constant 0 : i32
    return %c0_i32, %arg1 : i32, i32
  }
  func.func @transform_2(%arg0: i32, %arg1: i32) -> (i32, i32) {
    %c0_i32 = arith.constant 0 : i32
    %c0_i32_0 = arith.constant 0 : i32
    return %c0_i32, %arg1 : i32, i32
  }
  func.func @transform_3(%arg0: i32, %arg1: i32) -> (i32, i32) {
    %c0_i32 = arith.constant 0 : i32
    %c0_i32_0 = arith.constant 0 : i32
    return %arg1, %c0_i32 : i32, i32
  }
  func.func @transform_4(%arg0: i32, %arg1: i32) -> (i32, i32) {
    %c0_i32 = arith.constant 0 : i32
    %c0_i32_0 = arith.constant 0 : i32
    %c0_i32_1 = arith.constant 0 : i32
    return %c0_i32, %c0_i32_0 : i32, i32
  }
  func.func @transform_5(%arg0: i32, %arg1: i32) -> (i32, i32) {
    %c0_i32 = arith.constant 0 : i32
    %c0_i32_0 = arith.constant 0 : i32
    return %arg0, %c0_i32 : i32, i32
  }
}

</mosaic_0001>

<llo_original>
// kernel: tpu_custom_call.1
$region0: #{tpu_custom_call.1}
  #allocation0 [shape = 'u32[]', space=smem, size = 0x4, offset = 0x4, fixed_abs, tag = 'smem constant byte address 0x4 - core index']
  #allocation1 [shape = 'u32[144,128]{1,0:T(1,128)}', space=vmem, size = 0x12000, scoped, tag = 'internal scratch']
  #allocation2 [shape = 'f32[16,32]{1,0:T(8,128)}', space=vmem, size = 0x2000, scoped, tag = 'scratch operand']
  %s0 = inlined_call_operand.vmem [shape: bf16[16,32], index: 0, kind: input, shape index: {}]
  %s1 = inlined_call_operand.vmem [shape: bf16[32,128], index: 1, kind: input, shape index: {}]
  %s2 = inlined_call_operand.vmem [shape: f32[1,128], index: 2, kind: input, shape index: {}]
  %s3 = inlined_call_operand.vmem [shape: bf16[128,32], index: 3, kind: input, shape index: {}]
  %s4 = inlined_call_operand.vmem [shape: f32[1,32], index: 4, kind: input, shape index: {}]
  %s5 = inlined_call_operand.hbm [shape: f32[16,32], index: 5, kind: output, shape index: {}]
  %s6 = sld [smem:[#allocation0]]
  $region38: #{tpu_custom_call.1} parent=0
    _
  %s8 = ssub.s32 1, %s6
  %s9 = scalar_select 0, %s8, %s6
  $region1: #{tpu_custom_call.1} parent=0
    #allocation3 [shape = 'u8[8192]{0}', space=vmem, size = 0x2000, scoped, tag = 'output window, operand 0, single buffered']
    #allocation4 [shape = 's32[1]{0}', space=sflag, size = 0x4, scoped, tag = 'scoped memory for tpu_custom_call.1']
    %10 = vsyncpa [#allocation4], 0
    // Predicated region
    $region2: #{tpu_custom_call.1} parent=1 // pred_check
      _
    $region3: #{tpu_custom_call.1} parent=1 // pred_check_branch
      %12 = sbr.rel (0) target = $region5
    $region4: #{tpu_custom_call.1} parent=1 // pred_region
      _
    $region5: #{tpu_custom_call.1} parent=1 // pred_fallthru
      _
    // Predicated region
    $region6: #{tpu_custom_call.1} parent=1 // pred_check
      _
    $region7: #{tpu_custom_call.1} parent=1 // pred_check_branch
      %14 = sbr.rel (0) target = $region9
    $region8: #{tpu_custom_call.1} parent=1 // pred_region
      _
    $region9: #{tpu_custom_call.1} parent=1 // pred_fallthru
      _
    // Predicated region
    $region10: #{tpu_custom_call.1} parent=1 // pred_check
      _
    $region11: #{tpu_custom_call.1} parent=1 // pred_check_branch
      %16 = sbr.rel (0) target = $region13
    $region12: #{tpu_custom_call.1} parent=1 // pred_region
      _
    $region13: #{tpu_custom_call.1} parent=1 // pred_fallthru
      _
    // Predicated region
    $region14: #{tpu_custom_call.1} parent=1 // pred_check
      _
    $region15: #{tpu_custom_call.1} parent=1 // pred_check_branch
      %18 = sbr.rel (0) target = $region17
    $region16: #{tpu_custom_call.1} parent=1 // pred_region
      _
    $region17: #{tpu_custom_call.1} parent=1 // pred_fallthru
      _
    // Predicated region
    $region18: #{tpu_custom_call.1} parent=1 // pred_check
      _
    $region19: #{tpu_custom_call.1} parent=1 // pred_check_branch
      %20 = sbr.rel (0) target = $region21
    $region20: #{tpu_custom_call.1} parent=1 // pred_region
      _
    $region21: #{tpu_custom_call.1} parent=1 // pred_fallthru
      _
    %p22 = scmp.eq.s32.totalorder 0, 0
    // Predicated region
    $region22: #{tpu_custom_call.1} parent=1 // pred_check
      %p23 = pneg %p22
    $region23: #{tpu_custom_call.1} parent=1 // pred_check_branch
      %25 = sbr.rel (%p23) target = $region25
    $region24: #{tpu_custom_call.1} parent=1 // pred_region
      %vm26 = vcmask 261120
      %27 = vst.msk [vmem:[#allocation2] sm:$0xff] %vm26, 0.0
      %28 = vst.msk [vmem:[#allocation2 + $0x8] sm:$0xff] %vm26, 0.0
    $region25: #{tpu_custom_call.1} parent=1 // pred_fallthru
      _
    %v29 = vld [vmem:[%s0] sm:$0xf]
    %v30 = vld [vmem:[%s0 + $0x4] sm:$0xf]
    %v31 = vld [vmem:[%s1] sm:$0xf]
    %v32 = vld [vmem:[%s1 + $0x4] sm:$0xf]
    %v33 = vld [vmem:[%s1 + $0x8] sm:$0xf]
    %v34 = vld [vmem:[%s1 + $0xc] sm:$0xf]
    %v35 = vld [vmem:[%s2] sm:$0x1]
    %v37 = vlaneseq
    %v38 = vshrl.u32 %v37, 7
    %v39 = vsub.s32 0, %v38
    %v40 = vrot.slane %v35, %v39
    %v44 = vunpack.c.l.b16 %v29
    %v45 = vunpack.c.l.b16 %v30
    %v46 = vpack.c.b16 %v45, %v44
    %v51 = vunpack.c.l.b16 %v31
    %v52 = vunpack.c.l.b16 %v32
    %v53 = vunpack.c.l.b16 %v33
    %v54 = vunpack.c.l.b16 %v34
    %v55 = vpack.c.b16 %v52, %v51
    %v56 = vpack.c.b16 %v54, %v53
    %vm59 = vcmask 261120
    %v61 = vsel %vm59, %v46, 0
    %63 = vmatprep.subr.bf16.mxu0 0
    %64 = vmatpush1.bf16.msra.mxu0 %v55
    %65 = vmatprep.subr.bf16.mxu0 0
    %66 = vmatpush1.bf16.msra.mxu0 %v56
    %67 = vmatprep.subr.bf16.mxu0 0
    %68 = vmatpush1.bf16.msra.mxu0 0
    %69 = vmatprep.subr.bf16.mxu0 0
    %70 = vmatpush1.bf16.msra.mxu0 0
    %71 = vmatprep.subr.bf16.mxu0 0
    %72 = vmatpush1.bf16.msra.mxu0 0
    %73 = vmatprep.subr.bf16.mxu0 0
    %74 = vmatpush1.bf16.msra.mxu0 0
    %75 = vmatprep.subr.bf16.mxu0 0
    %76 = vmatpush1.bf16.msra.mxu0 0
    %77 = vmatprep.subr.bf16.mxu0 0
    %78 = vmatpush1.bf16.msra.mxu0 0
    %79 = vmatprep.subr.bf16.mxu0 0
    %80 = vmatpush1.bf16.msra.mxu0 0
    %81 = vmatprep.subr.bf16.mxu0 0
    %82 = vmatpush1.bf16.msra.mxu0 0
    %83 = vmatprep.subr.bf16.mxu0 0
    %84 = vmatpush1.bf16.msra.mxu0 0
    %85 = vmatprep.subr.bf16.mxu0 0
    %86 = vmatpush1.bf16.msra.mxu0 0
    %87 = vmatprep.subr.bf16.mxu0 0
    %88 = vmatpush1.bf16.msra.mxu0 0
    %89 = vmatprep.subr.bf16.mxu0 0
    %90 = vmatpush1.bf16.msra.mxu0 0
    %91 = vmatprep.subr.bf16.mxu0 0
    %92 = vmatpush1.bf16.msra.mxu0 0
    %93 = vmatprep.subr.bf16.mxu0 0
    %94 = vmatpush1.bf16.msra.mxu0 0
    %95 = vmatprep.mubr.bf16.mxu0 0
    %96 = vmatmul.mubr.bf16.gmra.mrb[0].mxu0 %v61
    %v97 = vpop.f32.mrb[0].mxu0
    %v98 = vadd.f32 %v40, %v97
    %v99 = vpop.f32.mrb[0].mxu0
    %v100 = vpop.f32.mrb[0].mxu0
    %v101 = vadd.f32 %v40, %v100
    %v102 = vpop.f32.mrb[0].mxu0
    %103 = vdwg.mxu0
    %v104 = vmul.f32 %v98, 0.5
    %v105 = vmul.f32 %v101, 0.5
    %v106 = vmul.f32 %v98, 0.70710677
    %v107 = vmul.f32 %v101, 0.70710677
    %v108 = verf.f32.pop %v106
    %v109 = verf.f32.pop %v107
    %v110 = vadd.f32 %v108, 1.0
    %v111 = vadd.f32 %v109, 1.0
    %v112 = vmul.f32 %v104, %v110
    %v113 = vmul.f32 %v105, %v111
    %v114 = vld [vmem:[#allocation2] sm:$0xff]
    %v115 = vld [vmem:[#allocation2 + $0x8] sm:$0xff]
    %v116 = vpack.c.bf16 %v113, %v112
    %v117 = vld [vmem:[%s3] sm:$0xf]
    %v118 = vld [vmem:[%s3 + $0x4] sm:$0xf]
    %v119 = vld [vmem:[%s3 + $0x8] sm:$0xf]
    %v120 = vld [vmem:[%s3 + $0xc] sm:$0xf]
    %v121 = vld [vmem:[%s3 + $0x10] sm:$0xf]
    %v122 = vld [vmem:[%s3 + $0x14] sm:$0xf]
    %v123 = vld [vmem:[%s3 + $0x18] sm:$0xf]
    %v124 = vld [vmem:[%s3 + $0x1c] sm:$0xf]
    %v125 = vld [vmem:[%s3 + $0x20] sm:$0xf]
    %v126 = vld [vmem:[%s3 + $0x24] sm:$0xf]
    %v127 = vld [vmem:[%s3 + $0x28] sm:$0xf]
    %v128 = vld [vmem:[%s3 + $0x2c] sm:$0xf]
    %v129 = vld [vmem:[%s3 + $0x30] sm:$0xf]
    %v130 = vld [vmem:[%s3 + $0x34] sm:$0xf]
    %v131 = vld [vmem:[%s3 + $0x38] sm:$0xf]
    %v132 = vld [vmem:[%s3 + $0x3c] sm:$0xf]
    %v149 = vunpack.c.l.b16 %v117
    %v150 = vunpack.c.l.b16 %v118
    %v151 = vunpack.c.l.b16 %v119
    %v152 = vunpack.c.l.b16 %v120
    %v153 = vunpack.c.l.b16 %v121
    %v154 = vunpack.c.l.b16 %v122
    %v155 = vunpack.c.l.b16 %v123
    %v156 = vunpack.c.l.b16 %v124
    %v157 = vunpack.c.l.b16 %v125
    %v158 = vunpack.c.l.b16 %v126
    %v159 = vunpack.c.l.b16 %v127
    %v160 = vunpack.c.l.b16 %v128
    %v161 = vunpack.c.l.b16 %v129
    %v162 = vunpack.c.l.b16 %v130
    %v163 = vunpack.c.l.b16 %v131
    %v164 = vunpack.c.l.b16 %v132
    %v165 = vpack.c.b16 %v150, %v149
    %v166 = vpack.c.b16 %v152, %v151
    %v167 = vpack.c.b16 %v154, %v153
    %v168 = vpack.c.b16 %v156, %v155
    %v169 = vpack.c.b16 %v158, %v157
    %v170 = vpack.c.b16 %v160, %v159
    %v171 = vpack.c.b16 %v162, %v161
    %v172 = vpack.c.b16 %v164, %v163
    %181 = vmatprep.subr.bf16.mxu0 0
    %182 = vmatpush1.bf16.msra.mxu0 %v165
    %183 = vmatprep.subr.bf16.mxu0 0
    %184 = vmatpush1.bf16.msra.mxu0 %v166
    %185 = vmatprep.subr.bf16.mxu0 0
    %186 = vmatpush1.bf16.msra.mxu0 %v167
    %187 = vmatprep.subr.bf16.mxu0 0
    %188 = vmatpush1.bf16.msra.mxu0 %v168
    %189 = vmatprep.subr.bf16.mxu0 0
    %190 = vmatpush1.bf16.msra.mxu0 %v169
    %191 = vmatprep.subr.bf16.mxu0 0
    %192 = vmatpush1.bf16.msra.mxu0 %v170
    %193 = vmatprep.subr.bf16.mxu0 0
    %194 = vmatpush1.bf16.msra.mxu0 %v171
    %195 = vmatprep.subr.bf16.mxu0 0
    %196 = vmatpush1.bf16.msra.mxu0 %v172
    %197 = vmatprep.subr.bf16.mxu0 0
    %198 = vmatpush1.bf16.msra.mxu0 0
    %199 = vmatprep.subr.bf16.mxu0 0
    %200 = vmatpush1.bf16.msra.mxu0 0
    %201 = vmatprep.subr.bf16.mxu0 0
    %202 = vmatpush1.bf16.msra.mxu0 0
    %203 = vmatprep.subr.bf16.mxu0 0
    %204 = vmatpush1.bf16.msra.mxu0 0
    %205 = vmatprep.subr.bf16.mxu0 0
    %206 = vmatpush1.bf16.msra.mxu0 0
    %207 = vmatprep.subr.bf16.mxu0 0
    %208 = vmatpush1.bf16.msra.mxu0 0
    %209 = vmatprep.subr.bf16.mxu0 0
    %210 = vmatpush1.bf16.msra.mxu0 0
    %211 = vmatprep.subr.bf16.mxu0 0
    %212 = vmatpush1.bf16.msra.mxu0 0
    %213 = vmatprep.mubr.bf16.mxu0 0
    %214 = vmatmul.mubr.bf16.gmra.mrb[0].mxu0 %v116
    %v215 = vpop.f32.mrb[0].mxu0
    %v216 = vadd.f32 0.0, %v215
    %v217 = vpop.f32.mrb[0].mxu0
    %v218 = vpop.f32.mrb[0].mxu0
    %v219 = vadd.f32 0.0, %v218
    %v220 = vpop.f32.mrb[0].mxu0
    %221 = vdwg.mxu0
    %v222 = vadd.f32 %v114, %v216
    %v223 = vadd.f32 %v115, %v219
    %224 = vst.msk [vmem:[#allocation2] sm:$0xff] %vm59, %v222
    %225 = vst.msk [vmem:[#allocation2 + $0x8] sm:$0xff] %vm59, %v223
    // Predicated region
    $region26: #{tpu_custom_call.1} parent=1 // pred_check
      %p226 = pneg %p22
    $region27: #{tpu_custom_call.1} parent=1 // pred_check_branch
      %228 = sbr.rel (%p226) target = $region29
    $region28: #{tpu_custom_call.1} parent=1 // pred_region
      %v229 = vld [vmem:[#allocation2] sm:$0xff]
      %v230 = vld [vmem:[#allocation2 + $0x8] sm:$0xff]
      %v231 = vld [vmem:[%s4] sm:$0x1]
      %v233 = vlaneseq
      %v234 = vshrl.u32 %v233, 7
      %v235 = vsub.s32 0, %v234
      %v236 = vrot.slane %v231, %v235
      %v238 = vadd.f32 %v229, %v236
      %v239 = vadd.f32 %v230, %v236
      %240 = vst.msk [vmem:[#allocation3] sm:$0xff] %vm59, %v238
      %241 = vst.msk [vmem:[#allocation3 + $0x8] sm:$0xff] %vm59, %v239
    $region29: #{tpu_custom_call.1} parent=1 // pred_fallthru
      _
    // Predicated region
    $region30: #{tpu_custom_call.1} parent=1 // pred_check
      _
    $region31: #{tpu_custom_call.1} parent=1 // pred_check_branch
      %243 = sbr.rel (0) target = $region33
    $region32: #{tpu_custom_call.1} parent=1 // pred_region
      %s245 = ssub.s32 256, 256
      %246 = vsyncadd [#allocation4], %s245
      %s247 = sshll.u32 [#allocation3], 4
      %s248 = int_to_ptr.vmem [resolvable:$true] %s247
      %253 = dma.vmem_to_hbm [thread:$0]  %s248, 256, %s5, [#allocation4], 128, 128, 8
    $region33: #{tpu_custom_call.1} parent=1 // pred_fallthru
      _
    // Predicated region
    $region34: #{tpu_custom_call.1} parent=1 // pred_check
      _
    $region35: #{tpu_custom_call.1} parent=1 // pred_check_branch
      %255 = sbr.rel (0) target = $region37
    $region36: #{tpu_custom_call.1} parent=1 // pred_region
      %256 = dma.done [#allocation4], 256
    $region37: #{tpu_custom_call.1} parent=1 // pred_fallthru
      _
    %257 = vsyncpa [#allocation4], 1

</llo_original>
